<compile_context>
chip_gen: v7x
topology: tpu7x:2x2x1
jax: 0.10.0
libtpu: 0.0.40
codegen_flags: <defaults>
</compile_context>

<pallas_src>
import math

import jax
import jax.numpy as jnp
from jax.experimental import pallas as pl
from jax.experimental.pallas import tpu as pltpu

LN_EPS = 1e-5                           # PyTorch nn.LayerNorm default
TARGET_TILE_ROWS = 1024                 # merged rows per grid step (~HBM-roofline plateau)
VMEM_TILE_BUDGET = 20 * 1024 * 1024     # honest per-step estimate: I/O + weights + f32 temps
VMEM_LIMIT_BYTES = 48 * 1024 * 1024     # explicit scoped-VMEM limit (safe on v5e/v6e/v7x)


def _merge_ln_reduce_kernel(x_ref, w_ref, b_ref, o_ref):
    """Fused 2x2 patch merge + LayerNorm(4C) + Linear(4C -> 2C, no bias).

    x_ref: (TI, 2, Wh, 2C)   raw input rows, dims = (b*Hh+i, dh, j, dw*C + c)
    w_ref: (4C, 2C)          gamma-scaled, quadrant-permuted W^T; rows = [x0,x2 | x1,x3]
    b_ref: (1, 2C)  f32      beta @ W^T
    o_ref: (TI*Wh, 2C)       output rows

    All per-row ops are strictly row-independent, so cdiv-padded boundary blocks are
    safe (out-of-range output rows are masked by Pallas).
    """
    x = x_ref[...]                                     # (TI, 2, Wh, 2C)
    ti, _, wh, c2 = x.shape
    top = x[:, 0, :, :].astype(jnp.float32)            # channels [x0 | x2]
    bot = x[:, 1, :, :].astype(jnp.float32)            # channels [x1 | x3]

    inv_4c = 1.0 / (2 * c2)
    mean = (jnp.sum(top, axis=-1, keepdims=True) +
            jnp.sum(bot, axis=-1, keepdims=True)) * inv_4c
    tc = top - mean
    bc = bot - mean
    var = (jnp.sum(tc * tc, axis=-1, keepdims=True) +
           jnp.sum(bc * bc, axis=-1, keepdims=True)) * inv_4c
    inv = jax.lax.rsqrt(var + LN_EPS)                  # f32 LayerNorm statistics

    mm_dtype = w_ref.dtype                             # bf16 when the model is bf16, else f32
    # (TI, Wh, 2C) -> (TI*Wh, 2C): free view when the collapse is tile-aligned; the
    # wrapper keeps TI*Wh a multiple of 8 so the output block stays sublane-dense.
    top_n = (tc * inv).astype(mm_dtype).reshape(ti * wh, c2)
    bot_n = (bc * inv).astype(mm_dtype).reshape(ti * wh, c2)

    w_top = w_ref[0:c2, :]                             # static slices of the resident weight
    w_bot = w_ref[c2:2 * c2, :]
    out = jnp.dot(top_n, w_top, preferred_element_type=jnp.float32)
    out = out + jnp.dot(bot_n, w_bot, preferred_element_type=jnp.float32)
    out = out + b_ref[...]
    o_ref[...] = out.astype(o_ref.dtype)


def _choose_row_tile(R, Wh, C, in_itemsize, out_itemsize, w_itemsize):
    """Pick TI (row-pairs per grid step).

    Targets ~TARGET_TILE_ROWS merged rows/step, keeps (TI*Wh) % 8 == 0 for the output
    block, fits an honest VMEM budget (double-buffered I/O, resident weight/bias,
    f32 intermediates), and rebalances the grid so every block is (nearly) the same
    size — no tiny trailing block, and both v7x TensorCores get equal work.  A problem
    that fits a single step is not split (v5e/v6e single-TC: splitting only adds
    per-step overhead)."""
    def rup(n, m):
        return -(-n // m) * m

    step = 8 // math.gcd(Wh, 8)           # smallest TI keeping TI*Wh a multiple of 8
    lanes = rup(2 * C, 128)               # lane-padded 2C

    # Grid-invariant residents (weight + bias), counted double-buffered (conservative;
    # constant index_map keeps their per-step DMAs trivial either way).
    fixed = 2 * (rup(4 * C, 8) * lanes * w_itemsize + 8 * lanes * 4)

    def tile_bytes(ti):
        rows_p = rup(ti * Wh, 8)
        in_blk = ti * 2 * rup(Wh, 8) * lanes * in_itemsize
        out_blk = rows_p * lanes * out_itemsize
        # f32 intermediates (top/bot, centered, normalized halves, f32 accumulator):
        interm = (5 * ti * rup(Wh, 8) + rows_p) * lanes * 4
        return 2 * (in_blk + out_blk) + interm + fixed

    target_ti = max(1, TARGET_TILE_ROWS // Wh)
    ti = R if target_ti >= R else max(step, (target_ti // step) * step)
    while ti > step and tile_bytes(ti) > VMEM_TILE_BUDGET:
        ti = max(step, ((ti // 2) // step) * step)
    if ti < R:
        n_steps = -(-R // ti)
        ti = min(R, rup(-(-R // n_steps), step))
    return ti


def patch_merging_forward(x, gamma, beta, weight, input_resolution):
    """x: (B, H*W, C); gamma/beta: (4C,); weight: (2C, 4C) (PyTorch Linear layout)."""
    H, W = input_resolution
    B, L, C = x.shape
    assert L == H * W, "input feature has wrong size"
    assert H % 2 == 0 and W % 2 == 0, f"x size ({H}*{W}) are not even."
    Hh, Wh = H // 2, W // 2
    C4, C2o = 4 * C, 2 * C
    R = B * Hh                            # row-pairs (one per 2 input rows)
    M = R * Wh                            # merged tokens

    # FREE reshape (pure row-major reinterpretation, no HBM copy):
    #   (B, H*W, C) -> (B*Hh, 2, Wh, 2C), dims = (b*Hh + i, dh, j, dw*C + c)
    x4 = x.reshape(R, 2, Wh, 2 * C)

    # Matmul operand dtype gated on the activation dtype (no silent bf16 downgrade
    # of an f32 model); LN statistics are always f32 inside the kernel.
    mm_dtype = jnp.bfloat16 if x.dtype == jnp.bfloat16 else jnp.float32

    # Fold the LayerNorm affine into the reduction weight, permuted to the kernel's
    # natural channel order [x0, x2, x1, x3] (vs torch's [x0, x1, x2, x3]).
    perm = jnp.concatenate([
        jnp.arange(0 * C, 1 * C), jnp.arange(2 * C, 3 * C),
        jnp.arange(1 * C, 2 * C), jnp.arange(3 * C, 4 * C)])
    w_t = weight.T.astype(jnp.float32)                                    # (4C, 2C)
    w_fold = (gamma.astype(jnp.float32)[:, None] * w_t)[perm, :].astype(mm_dtype)
    bias = (beta.astype(jnp.float32) @ w_t).reshape(1, C2o)               # (1, 2C) f32

    in_bytes = jnp.dtype(x.dtype).itemsize
    w_bytes = jnp.dtype(mm_dtype).itemsize
    ti = _choose_row_tile(R, Wh, C, in_bytes, in_bytes, w_bytes)
    tile_rows = ti * Wh
    grid = (pl.cdiv(R, ti),)

    cost = pl.CostEstimate(
        flops=2 * M * C4 * C2o,
        transcendentals=0,
        bytes_accessed=(M * C4 * in_bytes + M * C2o * in_bytes
                        + C4 * C2o * w_bytes + C2o * 4),
    )

    out2d = pl.pallas_call(
        _merge_ln_reduce_kernel,
        out_shape=jax.ShapeDtypeStruct((M, C2o), x.dtype),
        grid_spec=pltpu.PrefetchScalarGridSpec(
            num_scalar_prefetch=0,
            grid=grid,
            in_specs=[
                pl.BlockSpec((ti, 2, Wh, 2 * C), lambda i: (i, 0, 0, 0)),  # raw rows of x
                pl.BlockSpec((C4, C2o), lambda i: (0, 0)),                 # folded W^T
                pl.BlockSpec((1, C2o), lambda i: (0, 0)),                  # folded bias (f32)
            ],
            out_specs=pl.BlockSpec((tile_rows, C2o), lambda i: (i, 0)),
        ),
        compiler_params=pltpu.CompilerParams(
            dimension_semantics=("parallel",),
            vmem_limit_bytes=VMEM_LIMIT_BYTES,
        ),
        cost_estimate=cost,
    )(x4, w_fold, bias)

    return out2d.reshape(B, Hh * Wh, C2o)


if __name__ == "__main__":
    # Small shapes consistent with the module (BasicLayer downsample stage).
    B, C = 2, 4
    H, W = 16, 16

    key = jax.random.PRNGKey(0)
    kx, kw, kg, kb = jax.random.split(key, 4)

    x = jax.random.normal(kx, (B, H * W, C), dtype=jnp.float32)
    # PatchMerging params: norm = LayerNorm(4*dim); reduction = Linear(4*dim, 2*dim, bias=False)
    gamma = 1.0 + 0.1 * jax.random.normal(kg, (4 * C,), dtype=jnp.float32)
    beta = 0.1 * jax.random.normal(kb, (4 * C,), dtype=jnp.float32)
    weight = jax.random.normal(kw, (2 * C, 4 * C), dtype=jnp.float32) * 0.05

    fwd = jax.jit(patch_merging_forward, static_argnames=("input_resolution",))

    def reference(xr):
        # Pure-JAX f32 reference with the exact PyTorch op order.
        xv = xr.astype(jnp.float32).reshape(B, H, W, C)
        x0 = xv[:, 0::2, 0::2, :]
        x1 = xv[:, 1::2, 0::2, :]
        x2 = xv[:, 0::2, 1::2, :]
        x3 = xv[:, 1::2, 1::2, :]
        merged = jnp.concatenate([x0, x1, x2, x3], axis=-1).reshape(B, -1, 4 * C)
        mean = merged.mean(axis=-1, keepdims=True)
        var = ((merged - mean) ** 2).mean(axis=-1, keepdims=True)
        out = ((merged - mean) * jax.lax.rsqrt(var + LN_EPS)) * gamma + beta
        return out @ weight.T

    # f32 activation path (f32 MXU operands).
    out_f32 = jax.block_until_ready(fwd(x, gamma, beta, weight, input_resolution=(H, W)))
    assert out_f32.shape == (B, (H // 2) * (W // 2), 2 * C), out_f32.shape
    err_f32 = float(jnp.max(jnp.abs(out_f32 - reference(x))))
    assert err_f32 < 2e-2, f"f32 path: max |out - ref| = {err_f32}"

    # bf16 activation path (bf16 MXU operands, f32 LN stats and accumulation).
    x_bf16 = x.astype(jnp.bfloat16)
    out_bf16 = jax.block_until_ready(
        fwd(x_bf16, gamma, beta, weight, input_resolution=(H, W)))
    err_bf16 = float(jnp.max(jnp.abs(out_bf16.astype(jnp.float32) - reference(x_bf16))))
    assert err_bf16 < 5e-2, f"bf16 path: max |out - ref| = {err_bf16}"

    print("KERNEL_OK")
</pallas_src>

<mosaic_0001>
module attributes {stable_mosaic.version = 11 : i64} {
  func.func @_merge_ln_reduce_kernel(%arg0: i32, %arg1: memref<16x2x8x8xf32, #tpu.memory_space<vmem>>, %arg2: memref<16x8xf32, #tpu.memory_space<vmem>>, %arg3: memref<1x8xf32, #tpu.memory_space<vmem>>, %arg4: memref<128x8xf32, #tpu.memory_space<vmem>>) attributes {dimension_semantics = [#tpu.dimension_semantics<parallel>], iteration_bounds = array<i64: 1>, scalar_prefetch = 0 : i64, scratch_operands = 0 : i64, tpu.core_type = #tpu.core_type<tc>, window_params = [{transform_indices = @transform_0, window_bounds = array<i64: 16, 2, 8, 8>}, {pipeline_mode = #tpu.pipeline_mode<synchronous>, transform_indices = @transform_1, window_bounds = array<i64: 16, 8>}, {pipeline_mode = #tpu.pipeline_mode<synchronous>, transform_indices = @transform_2, window_bounds = array<i64: 1, 8>}, {transform_indices = @transform_3, window_bounds = array<i64: 128, 8>}]} {
    %c0 = arith.constant 0 : index
    %c0_0 = arith.constant 0 : index
    %c0_1 = arith.constant 0 : index
    %c0_2 = arith.constant 0 : index
    %0 = vector.load %arg1[%c0, %c0_0, %c0_1, %c0_2] : memref<16x2x8x8xf32, #tpu.memory_space<vmem>>, vector<16x2x8x8xf32>
    %1 = vector.extract_strided_slice %0 {offsets = [0, 0, 0, 0], sizes = [16, 1, 8, 8], strides = [1, 1, 1, 1]} : vector<16x2x8x8xf32> to vector<16x1x8x8xf32>
    %2 = vector.shape_cast %1 : vector<16x1x8x8xf32> to vector<16x8x8xf32>
    %3 = vector.extract_strided_slice %0 {offsets = [0, 1, 0, 0], sizes = [16, 1, 8, 8], strides = [1, 1, 1, 1]} : vector<16x2x8x8xf32> to vector<16x1x8x8xf32>
    %4 = vector.shape_cast %3 : vector<16x1x8x8xf32> to vector<16x8x8xf32>
    %cst = arith.constant dense<0.000000e+00> : vector<16x8xf32>
    %5 = vector.multi_reduction <add>, %2, %cst [2] : vector<16x8x8xf32> to vector<16x8xf32>
    %6 = vector.shape_cast %5 : vector<16x8xf32> to vector<16x8x1xf32>
    %cst_3 = arith.constant dense<0.000000e+00> : vector<16x8xf32>
    %7 = vector.multi_reduction <add>, %4, %cst_3 [2] : vector<16x8x8xf32> to vector<16x8xf32>
    %8 = vector.shape_cast %7 : vector<16x8xf32> to vector<16x8x1xf32>
    %9 = arith.addf %6, %8 : vector<16x8x1xf32>
    %cst_4 = arith.constant 6.250000e-02 : f32
    %10 = vector.broadcast %cst_4 : f32 to vector<16x8x1xf32>
    %11 = arith.mulf %9, %10 : vector<16x8x1xf32>
    %12 = vector.broadcast %11 : vector<16x8x1xf32> to vector<16x8x8xf32>
    %13 = arith.subf %2, %12 : vector<16x8x8xf32>
    %14 = vector.broadcast %11 : vector<16x8x1xf32> to vector<16x8x8xf32>
    %15 = arith.subf %4, %14 : vector<16x8x8xf32>
    %16 = arith.mulf %13, %13 : vector<16x8x8xf32>
    %cst_5 = arith.constant dense<0.000000e+00> : vector<16x8xf32>
    %17 = vector.multi_reduction <add>, %16, %cst_5 [2] : vector<16x8x8xf32> to vector<16x8xf32>
    %18 = vector.shape_cast %17 : vector<16x8xf32> to vector<16x8x1xf32>
    %19 = arith.mulf %15, %15 : vector<16x8x8xf32>
    %cst_6 = arith.constant dense<0.000000e+00> : vector<16x8xf32>
    %20 = vector.multi_reduction <add>, %19, %cst_6 [2] : vector<16x8x8xf32> to vector<16x8xf32>
    %21 = vector.shape_cast %20 : vector<16x8xf32> to vector<16x8x1xf32>
    %22 = arith.addf %18, %21 : vector<16x8x1xf32>
    %cst_7 = arith.constant 6.250000e-02 : f32
    %23 = vector.broadcast %cst_7 : f32 to vector<16x8x1xf32>
    %24 = arith.mulf %22, %23 : vector<16x8x1xf32>
    %cst_8 = arith.constant 9.99999974E-6 : f32
    %25 = vector.broadcast %cst_8 : f32 to vector<16x8x1xf32>
    %26 = arith.addf %24, %25 : vector<16x8x1xf32>
    %27 = math.rsqrt %26 : vector<16x8x1xf32>
    %28 = vector.broadcast %27 : vector<16x8x1xf32> to vector<16x8x8xf32>
    %29 = arith.mulf %13, %28 : vector<16x8x8xf32>
    %30 = vector.shape_cast %29 : vector<16x8x8xf32> to vector<128x8xf32>
    %31 = vector.broadcast %27 : vector<16x8x1xf32> to vector<16x8x8xf32>
    %32 = arith.mulf %15, %31 : vector<16x8x8xf32>
    %33 = vector.shape_cast %32 : vector<16x8x8xf32> to vector<128x8xf32>
    %c0_9 = arith.constant 0 : index
    %c0_10 = arith.constant 0 : index
    %34 = vector.load %arg2[%c0_9, %c0_10] : memref<16x8xf32, #tpu.memory_space<vmem>>, vector<8x8xf32>
    %c8 = arith.constant 8 : index
    %c0_11 = arith.constant 0 : index
    %35 = vector.load %arg2[%c8, %c0_11] : memref<16x8xf32, #tpu.memory_space<vmem>>, vector<8x8xf32>
    %cst_12 = arith.constant dense<0.000000e+00> : vector<128x8xf32>
    %36 = tpu.matmul %30, %34, %cst_12 {dimension_numbers = #tpu.dot_dimension_numbers<[1], [0], [0], [1], [0, 0, 1, 1], [], []>} : vector<128x8xf32>, vector<8x8xf32>, vector<128x8xf32> -> vector<128x8xf32>
    %cst_13 = arith.constant dense<0.000000e+00> : vector<128x8xf32>
    %37 = tpu.matmul %33, %35, %cst_13 {dimension_numbers = #tpu.dot_dimension_numbers<[1], [0], [0], [1], [0, 0, 1, 1], [], []>} : vector<128x8xf32>, vector<8x8xf32>, vector<128x8xf32> -> vector<128x8xf32>
    %38 = arith.addf %36, %37 : vector<128x8xf32>
    %c0_14 = arith.constant 0 : index
    %c0_15 = arith.constant 0 : index
    %39 = vector.load %arg3[%c0_14, %c0_15] : memref<1x8xf32, #tpu.memory_space<vmem>>, vector<1x8xf32>
    %40 = vector.broadcast %39 : vector<1x8xf32> to vector<128x8xf32>
    %41 = arith.addf %38, %40 : vector<128x8xf32>
    %c0_16 = arith.constant 0 : index
    %c0_17 = arith.constant 0 : index
    %42 = vector.load %arg4[%c0_16, %c0_17] : memref<128x8xf32, #tpu.memory_space<vmem>>, vector<128x8xf32>
    tpu.vector_store %arg4[%c0_16, %c0_17], %41 {strides = array<i32>} : memref<128x8xf32, #tpu.memory_space<vmem>>, vector<128x8xf32>,
    return
  }
  func.func @transform_0(%arg0: i32) -> (i32, i32, i32, i32) {
    %c0_i32 = arith.constant 0 : i32
    %c0_i32_0 = arith.constant 0 : i32
    %c0_i32_1 = arith.constant 0 : i32
    %c0_i32_2 = arith.constant 0 : i32
    return %arg0, %c0_i32, %c0_i32_0, %c0_i32_1 : i32, i32, i32, i32
  }
  func.func @transform_1(%arg0: i32) -> (i32, i32) {
    %c0_i32 = arith.constant 0 : i32
    %c0_i32_0 = arith.constant 0 : i32
    %c0_i32_1 = arith.constant 0 : i32
    return %c0_i32, %c0_i32_0 : i32, i32
  }
  func.func @transform_2(%arg0: i32) -> (i32, i32) {
    %c0_i32 = arith.constant 0 : i32
    %c0_i32_0 = arith.constant 0 : i32
    %c0_i32_1 = arith.constant 0 : i32
    return %c0_i32, %c0_i32_0 : i32, i32
  }
  func.func @transform_3(%arg0: i32) -> (i32, i32) {
    %c0_i32 = arith.constant 0 : i32
    %c0_i32_0 = arith.constant 0 : i32
    return %arg0, %c0_i32 : i32, i32
  }
}

</mosaic_0001>

<llo_original>
// kernel: patch_merging_forward.1
$region0: #{patch_merging_forward.1}
  #allocation0 [shape = 'u32[]', space=smem, size = 0x4, offset = 0x4, fixed_abs, tag = 'smem constant byte address 0x4 - core index']
  #allocation1 [shape = 'u32[144,128]{1,0:T(1,128)}', space=vmem, size = 0x12000, scoped, tag = 'internal scratch']
  %s0 = inlined_call_operand.vmem [shape: f32[16,2,8,8], index: 0, kind: input, shape index: {}]
  %s1 = inlined_call_operand.vmem [shape: f32[16,8], index: 1, kind: input, shape index: {}]
  %s2 = inlined_call_operand.vmem [shape: f32[1,8], index: 2, kind: input, shape index: {}]
  %s3 = inlined_call_operand.vmem [shape: f32[128,8], index: 3, kind: output, shape index: {}]
  %s4 = sld [smem:[#allocation0]]
  $region22: #{patch_merging_forward.1} parent=0
    _
  %s6 = ssub.s32 1, %s4
  %s7 = scalar_select 0, %s6, %s4
  // Predicated region
  $region2: #{patch_merging_forward.1} parent=0 // pred_check
    _
  $region3: #{patch_merging_forward.1} parent=0 // pred_check_branch
    %9 = sbr.rel (0) target = $region5
  $region4: #{patch_merging_forward.1} parent=0 // pred_region
    _
  $region5: #{patch_merging_forward.1} parent=0 // pred_fallthru
    _
  // Predicated region
  $region6: #{patch_merging_forward.1} parent=0 // pred_check
    _
  $region7: #{patch_merging_forward.1} parent=0 // pred_check_branch
    %11 = sbr.rel (0) target = $region9
  $region8: #{patch_merging_forward.1} parent=0 // pred_region
    _
  $region9: #{patch_merging_forward.1} parent=0 // pred_fallthru
    _
  // Predicated region
  $region10: #{patch_merging_forward.1} parent=0 // pred_check
    _
  $region11: #{patch_merging_forward.1} parent=0 // pred_check_branch
    %13 = sbr.rel (0) target = $region13
  $region12: #{patch_merging_forward.1} parent=0 // pred_region
    _
  $region13: #{patch_merging_forward.1} parent=0 // pred_fallthru
    _
  %v14 = vld [vmem:[%s0] sm:$0xff]
  %v15 = vld [vmem:[%s0 + $0x8] sm:$0xff]
  %v16 = vld [vmem:[%s0 + $0x10] sm:$0xff]
  %v17 = vld [vmem:[%s0 + $0x18] sm:$0xff]
  %v18 = vld [vmem:[%s0 + $0x20] sm:$0xff]
  %v19 = vld [vmem:[%s0 + $0x28] sm:$0xff]
  %v20 = vld [vmem:[%s0 + $0x30] sm:$0xff]
  %v21 = vld [vmem:[%s0 + $0x38] sm:$0xff]
  %v22 = vld [vmem:[%s0 + $0x40] sm:$0xff]
  %v23 = vld [vmem:[%s0 + $0x48] sm:$0xff]
  %v24 = vld [vmem:[%s0 + $0x50] sm:$0xff]
  %v25 = vld [vmem:[%s0 + $0x58] sm:$0xff]
  %v26 = vld [vmem:[%s0 + $0x60] sm:$0xff]
  %v27 = vld [vmem:[%s0 + $0x68] sm:$0xff]
  %v28 = vld [vmem:[%s0 + $0x70] sm:$0xff]
  %v29 = vld [vmem:[%s0 + $0x78] sm:$0xff]
  %v30 = vld [vmem:[%s0 + $0x80] sm:$0xff]
  %v31 = vld [vmem:[%s0 + $0x88] sm:$0xff]
  %v32 = vld [vmem:[%s0 + $0x90] sm:$0xff]
  %v33 = vld [vmem:[%s0 + $0x98] sm:$0xff]
  %v34 = vld [vmem:[%s0 + $0xa0] sm:$0xff]
  %v35 = vld [vmem:[%s0 + $0xa8] sm:$0xff]
  %v36 = vld [vmem:[%s0 + $0xb0] sm:$0xff]
  %v37 = vld [vmem:[%s0 + $0xb8] sm:$0xff]
  %v38 = vld [vmem:[%s0 + $0xc0] sm:$0xff]
  %v39 = vld [vmem:[%s0 + $0xc8] sm:$0xff]
  %v40 = vld [vmem:[%s0 + $0xd0] sm:$0xff]
  %v41 = vld [vmem:[%s0 + $0xd8] sm:$0xff]
  %v42 = vld [vmem:[%s0 + $0xe0] sm:$0xff]
  %v43 = vld [vmem:[%s0 + $0xe8] sm:$0xff]
  %v44 = vld [vmem:[%s0 + $0xf0] sm:$0xff]
  %v45 = vld [vmem:[%s0 + $0xf8] sm:$0xff]
  %vm46 = vcmask 64512
  %v47 = vsel %vm46, %v14, 0.0
  %48 = vadd.xlane.f32.xlu0 %v47
  %v49 = vpop.xlane.xlu0 %48
  %v50 = vsel %vm46, %v16, 0.0
  %51 = vadd.xlane.f32.xlu0 %v50
  %v52 = vpop.xlane.xlu0 %51
  %v53 = vsel %vm46, %v18, 0.0
  %54 = vadd.xlane.f32.xlu0 %v53
  %v55 = vpop.xlane.xlu0 %54
  %v56 = vsel %vm46, %v20, 0.0
  %57 = vadd.xlane.f32.xlu0 %v56
  %v58 = vpop.xlane.xlu0 %57
  %v59 = vsel %vm46, %v22, 0.0
  %60 = vadd.xlane.f32.xlu0 %v59
  %v61 = vpop.xlane.xlu0 %60
  %v62 = vsel %vm46, %v24, 0.0
  %63 = vadd.xlane.f32.xlu0 %v62
  %v64 = vpop.xlane.xlu0 %63
  %v65 = vsel %vm46, %v26, 0.0
  %66 = vadd.xlane.f32.xlu0 %v65
  %v67 = vpop.xlane.xlu0 %66
  %v68 = vsel %vm46, %v28, 0.0
  %69 = vadd.xlane.f32.xlu0 %v68
  %v70 = vpop.xlane.xlu0 %69
  %v71 = vsel %vm46, %v30, 0.0
  %72 = vadd.xlane.f32.xlu0 %v71
  %v73 = vpop.xlane.xlu0 %72
  %v74 = vsel %vm46, %v32, 0.0
  %75 = vadd.xlane.f32.xlu0 %v74
  %v76 = vpop.xlane.xlu0 %75
  %v77 = vsel %vm46, %v34, 0.0
  %78 = vadd.xlane.f32.xlu0 %v77
  %v79 = vpop.xlane.xlu0 %78
  %v80 = vsel %vm46, %v36, 0.0
  %81 = vadd.xlane.f32.xlu0 %v80
  %v82 = vpop.xlane.xlu0 %81
  %v83 = vsel %vm46, %v38, 0.0
  %84 = vadd.xlane.f32.xlu0 %v83
  %v85 = vpop.xlane.xlu0 %84
  %v86 = vsel %vm46, %v40, 0.0
  %87 = vadd.xlane.f32.xlu0 %v86
  %v88 = vpop.xlane.xlu0 %87
  %v89 = vsel %vm46, %v42, 0.0
  %90 = vadd.xlane.f32.xlu0 %v89
  %v91 = vpop.xlane.xlu0 %90
  %v92 = vsel %vm46, %v44, 0.0
  %93 = vadd.xlane.f32.xlu0 %v92
  %v94 = vpop.xlane.xlu0 %93
  %v95 = vsel %vm46, %v15, 0.0
  %96 = vadd.xlane.f32.xlu0 %v95
  %v97 = vpop.xlane.xlu0 %96
  %v98 = vsel %vm46, %v17, 0.0
  %99 = vadd.xlane.f32.xlu0 %v98
  %v100 = vpop.xlane.xlu0 %99
  %v101 = vsel %vm46, %v19, 0.0
  %102 = vadd.xlane.f32.xlu0 %v101
  %v103 = vpop.xlane.xlu0 %102
  %v104 = vsel %vm46, %v21, 0.0
  %105 = vadd.xlane.f32.xlu0 %v104
  %v106 = vpop.xlane.xlu0 %105
  %v107 = vsel %vm46, %v23, 0.0
  %108 = vadd.xlane.f32.xlu0 %v107
  %v109 = vpop.xlane.xlu0 %108
  %v110 = vsel %vm46, %v25, 0.0
  %111 = vadd.xlane.f32.xlu0 %v110
  %v112 = vpop.xlane.xlu0 %111
  %v113 = vsel %vm46, %v27, 0.0
  %114 = vadd.xlane.f32.xlu0 %v113
  %v115 = vpop.xlane.xlu0 %114
  %v116 = vsel %vm46, %v29, 0.0
  %117 = vadd.xlane.f32.xlu0 %v116
  %v118 = vpop.xlane.xlu0 %117
  %v119 = vsel %vm46, %v31, 0.0
  %120 = vadd.xlane.f32.xlu0 %v119
  %v121 = vpop.xlane.xlu0 %120
  %v122 = vsel %vm46, %v33, 0.0
  %123 = vadd.xlane.f32.xlu0 %v122
  %v124 = vpop.xlane.xlu0 %123
  %v125 = vsel %vm46, %v35, 0.0
  %126 = vadd.xlane.f32.xlu0 %v125
  %v127 = vpop.xlane.xlu0 %126
  %v128 = vsel %vm46, %v37, 0.0
  %129 = vadd.xlane.f32.xlu0 %v128
  %v130 = vpop.xlane.xlu0 %129
  %v131 = vsel %vm46, %v39, 0.0
  %132 = vadd.xlane.f32.xlu0 %v131
  %v133 = vpop.xlane.xlu0 %132
  %v134 = vsel %vm46, %v41, 0.0
  %135 = vadd.xlane.f32.xlu0 %v134
  %v136 = vpop.xlane.xlu0 %135
  %v137 = vsel %vm46, %v43, 0.0
  %138 = vadd.xlane.f32.xlu0 %v137
  %v139 = vpop.xlane.xlu0 %138
  %v140 = vsel %vm46, %v45, 0.0
  %141 = vadd.xlane.f32.xlu0 %v140
  %v142 = vpop.xlane.xlu0 %141
  %v143 = vadd.f32 %v49, %v97
  %v144 = vadd.f32 %v52, %v100
  %v145 = vadd.f32 %v55, %v103
  %v146 = vadd.f32 %v58, %v106
  %v147 = vadd.f32 %v61, %v109
  %v148 = vadd.f32 %v64, %v112
  %v149 = vadd.f32 %v67, %v115
  %v150 = vadd.f32 %v70, %v118
  %v151 = vadd.f32 %v73, %v121
  %v152 = vadd.f32 %v76, %v124
  %v153 = vadd.f32 %v79, %v127
  %v154 = vadd.f32 %v82, %v130
  %v155 = vadd.f32 %v85, %v133
  %v156 = vadd.f32 %v88, %v136
  %v157 = vadd.f32 %v91, %v139
  %v158 = vadd.f32 %v94, %v142
  %v159 = vmul.f32 %v143, 0.0625
  %v160 = vmul.f32 %v144, 0.0625
  %v161 = vmul.f32 %v145, 0.0625
  %v162 = vmul.f32 %v146, 0.0625
  %v163 = vmul.f32 %v147, 0.0625
  %v164 = vmul.f32 %v148, 0.0625
  %v165 = vmul.f32 %v149, 0.0625
  %v166 = vmul.f32 %v150, 0.0625
  %v167 = vmul.f32 %v151, 0.0625
  %v168 = vmul.f32 %v152, 0.0625
  %v169 = vmul.f32 %v153, 0.0625
  %v170 = vmul.f32 %v154, 0.0625
  %v171 = vmul.f32 %v155, 0.0625
  %v172 = vmul.f32 %v156, 0.0625
  %v173 = vmul.f32 %v157, 0.0625
  %v174 = vmul.f32 %v158, 0.0625
  %v175 = vsub.f32 %v14, %v159
  %v176 = vsub.f32 %v16, %v160
  %v177 = vsub.f32 %v18, %v161
  %v178 = vsub.f32 %v20, %v162
  %v179 = vsub.f32 %v22, %v163
  %v180 = vsub.f32 %v24, %v164
  %v181 = vsub.f32 %v26, %v165
  %v182 = vsub.f32 %v28, %v166
  %v183 = vsub.f32 %v30, %v167
  %v184 = vsub.f32 %v32, %v168
  %v185 = vsub.f32 %v34, %v169
  %v186 = vsub.f32 %v36, %v170
  %v187 = vsub.f32 %v38, %v171
  %v188 = vsub.f32 %v40, %v172
  %v189 = vsub.f32 %v42, %v173
  %v190 = vsub.f32 %v44, %v174
  %v191 = vsub.f32 %v15, %v159
  %v192 = vsub.f32 %v17, %v160
  %v193 = vsub.f32 %v19, %v161
  %v194 = vsub.f32 %v21, %v162
  %v195 = vsub.f32 %v23, %v163
  %v196 = vsub.f32 %v25, %v164
  %v197 = vsub.f32 %v27, %v165
  %v198 = vsub.f32 %v29, %v166
  %v199 = vsub.f32 %v31, %v167
  %v200 = vsub.f32 %v33, %v168
  %v201 = vsub.f32 %v35, %v169
  %v202 = vsub.f32 %v37, %v170
  %v203 = vsub.f32 %v39, %v171
  %v204 = vsub.f32 %v41, %v172
  %v205 = vsub.f32 %v43, %v173
  %v206 = vsub.f32 %v45, %v174
  %v207 = vmul.f32 %v175, %v175
  %v208 = vmul.f32 %v176, %v176
  %v209 = vmul.f32 %v177, %v177
  %v210 = vmul.f32 %v178, %v178
  %v211 = vmul.f32 %v179, %v179
  %v212 = vmul.f32 %v180, %v180
  %v213 = vmul.f32 %v181, %v181
  %v214 = vmul.f32 %v182, %v182
  %v215 = vmul.f32 %v183, %v183
  %v216 = vmul.f32 %v184, %v184
  %v217 = vmul.f32 %v185, %v185
  %v218 = vmul.f32 %v186, %v186
  %v219 = vmul.f32 %v187, %v187
  %v220 = vmul.f32 %v188, %v188
  %v221 = vmul.f32 %v189, %v189
  %v222 = vmul.f32 %v190, %v190
  %v223 = vsel %vm46, %v207, 0.0
  %224 = vadd.xlane.f32.xlu0 %v223
  %v225 = vpop.xlane.xlu0 %224
  %v226 = vsel %vm46, %v208, 0.0
  %227 = vadd.xlane.f32.xlu0 %v226
  %v228 = vpop.xlane.xlu0 %227
  %v229 = vsel %vm46, %v209, 0.0
  %230 = vadd.xlane.f32.xlu0 %v229
  %v231 = vpop.xlane.xlu0 %230
  %v232 = vsel %vm46, %v210, 0.0
  %233 = vadd.xlane.f32.xlu0 %v232
  %v234 = vpop.xlane.xlu0 %233
  %v235 = vsel %vm46, %v211, 0.0
  %236 = vadd.xlane.f32.xlu0 %v235
  %v237 = vpop.xlane.xlu0 %236
  %v238 = vsel %vm46, %v212, 0.0
  %239 = vadd.xlane.f32.xlu0 %v238
  %v240 = vpop.xlane.xlu0 %239
  %v241 = vsel %vm46, %v213, 0.0
  %242 = vadd.xlane.f32.xlu0 %v241
  %v243 = vpop.xlane.xlu0 %242
  %v244 = vsel %vm46, %v214, 0.0
  %245 = vadd.xlane.f32.xlu0 %v244
  %v246 = vpop.xlane.xlu0 %245
  %v247 = vsel %vm46, %v215, 0.0
  %248 = vadd.xlane.f32.xlu0 %v247
  %v249 = vpop.xlane.xlu0 %248
  %v250 = vsel %vm46, %v216, 0.0
  %251 = vadd.xlane.f32.xlu0 %v250
  %v252 = vpop.xlane.xlu0 %251
  %v253 = vsel %vm46, %v217, 0.0
  %254 = vadd.xlane.f32.xlu0 %v253
  %v255 = vpop.xlane.xlu0 %254
  %v256 = vsel %vm46, %v218, 0.0
  %257 = vadd.xlane.f32.xlu0 %v256
  %v258 = vpop.xlane.xlu0 %257
  %v259 = vsel %vm46, %v219, 0.0
  %260 = vadd.xlane.f32.xlu0 %v259
  %v261 = vpop.xlane.xlu0 %260
  %v262 = vsel %vm46, %v220, 0.0
  %263 = vadd.xlane.f32.xlu0 %v262
  %v264 = vpop.xlane.xlu0 %263
  %v265 = vsel %vm46, %v221, 0.0
  %266 = vadd.xlane.f32.xlu0 %v265
  %v267 = vpop.xlane.xlu0 %266
  %v268 = vsel %vm46, %v222, 0.0
  %269 = vadd.xlane.f32.xlu0 %v268
  %v270 = vpop.xlane.xlu0 %269
  %v271 = vmul.f32 %v191, %v191
  %v272 = vmul.f32 %v192, %v192
  %v273 = vmul.f32 %v193, %v193
  %v274 = vmul.f32 %v194, %v194
  %v275 = vmul.f32 %v195, %v195
  %v276 = vmul.f32 %v196, %v196
  %v277 = vmul.f32 %v197, %v197
  %v278 = vmul.f32 %v198, %v198
  %v279 = vmul.f32 %v199, %v199
  %v280 = vmul.f32 %v200, %v200
  %v281 = vmul.f32 %v201, %v201
  %v282 = vmul.f32 %v202, %v202
  %v283 = vmul.f32 %v203, %v203
  %v284 = vmul.f32 %v204, %v204
  %v285 = vmul.f32 %v205, %v205
  %v286 = vmul.f32 %v206, %v206
  %v287 = vsel %vm46, %v271, 0.0
  %288 = vadd.xlane.f32.xlu0 %v287
  %v289 = vpop.xlane.xlu0 %288
  %v290 = vsel %vm46, %v272, 0.0
  %291 = vadd.xlane.f32.xlu0 %v290
  %v292 = vpop.xlane.xlu0 %291
  %v293 = vsel %vm46, %v273, 0.0
  %294 = vadd.xlane.f32.xlu0 %v293
  %v295 = vpop.xlane.xlu0 %294
  %v296 = vsel %vm46, %v274, 0.0
  %297 = vadd.xlane.f32.xlu0 %v296
  %v298 = vpop.xlane.xlu0 %297
  %v299 = vsel %vm46, %v275, 0.0
  %300 = vadd.xlane.f32.xlu0 %v299
  %v301 = vpop.xlane.xlu0 %300
  %v302 = vsel %vm46, %v276, 0.0
  %303 = vadd.xlane.f32.xlu0 %v302
  %v304 = vpop.xlane.xlu0 %303
  %v305 = vsel %vm46, %v277, 0.0
  %306 = vadd.xlane.f32.xlu0 %v305
  %v307 = vpop.xlane.xlu0 %306
  %v308 = vsel %vm46, %v278, 0.0
  %309 = vadd.xlane.f32.xlu0 %v308
  %v310 = vpop.xlane.xlu0 %309
  %v311 = vsel %vm46, %v279, 0.0
  %312 = vadd.xlane.f32.xlu0 %v311
  %v313 = vpop.xlane.xlu0 %312
  %v314 = vsel %vm46, %v280, 0.0
  %315 = vadd.xlane.f32.xlu0 %v314
  %v316 = vpop.xlane.xlu0 %315
  %v317 = vsel %vm46, %v281, 0.0
  %318 = vadd.xlane.f32.xlu0 %v317
  %v319 = vpop.xlane.xlu0 %318
  %v320 = vsel %vm46, %v282, 0.0
  %321 = vadd.xlane.f32.xlu0 %v320
  %v322 = vpop.xlane.xlu0 %321
  %v323 = vsel %vm46, %v283, 0.0
  %324 = vadd.xlane.f32.xlu0 %v323
  %v325 = vpop.xlane.xlu0 %324
  %v326 = vsel %vm46, %v284, 0.0
  %327 = vadd.xlane.f32.xlu0 %v326
  %v328 = vpop.xlane.xlu0 %327
  %v329 = vsel %vm46, %v285, 0.0
  %330 = vadd.xlane.f32.xlu0 %v329
  %v331 = vpop.xlane.xlu0 %330
  %v332 = vsel %vm46, %v286, 0.0
  %333 = vadd.xlane.f32.xlu0 %v332
  %v334 = vpop.xlane.xlu0 %333
  %v335 = vadd.f32 %v225, %v289
  %v336 = vadd.f32 %v228, %v292
  %v337 = vadd.f32 %v231, %v295
  %v338 = vadd.f32 %v234, %v298
  %v339 = vadd.f32 %v237, %v301
  %v340 = vadd.f32 %v240, %v304
  %v341 = vadd.f32 %v243, %v307
  %v342 = vadd.f32 %v246, %v310
  %v343 = vadd.f32 %v249, %v313
  %v344 = vadd.f32 %v252, %v316
  %v345 = vadd.f32 %v255, %v319
  %v346 = vadd.f32 %v258, %v322
  %v347 = vadd.f32 %v261, %v325
  %v348 = vadd.f32 %v264, %v328
  %v349 = vadd.f32 %v267, %v331
  %v350 = vadd.f32 %v270, %v334
  %v351 = vmul.f32 %v335, 0.0625
  %v352 = vmul.f32 %v336, 0.0625
  %v353 = vmul.f32 %v337, 0.0625
  %v354 = vmul.f32 %v338, 0.0625
  %v355 = vmul.f32 %v339, 0.0625
  %v356 = vmul.f32 %v340, 0.0625
  %v357 = vmul.f32 %v341, 0.0625
  %v358 = vmul.f32 %v342, 0.0625
  %v359 = vmul.f32 %v343, 0.0625
  %v360 = vmul.f32 %v344, 0.0625
  %v361 = vmul.f32 %v345, 0.0625
  %v362 = vmul.f32 %v346, 0.0625
  %v363 = vmul.f32 %v347, 0.0625
  %v364 = vmul.f32 %v348, 0.0625
  %v365 = vmul.f32 %v349, 0.0625
  %v366 = vmul.f32 %v350, 0.0625
  %v367 = vadd.f32 %v351, 1e-05
  %v368 = vadd.f32 %v352, 1e-05
  %v369 = vadd.f32 %v353, 1e-05
  %v370 = vadd.f32 %v354, 1e-05
  %v371 = vadd.f32 %v355, 1e-05
  %v372 = vadd.f32 %v356, 1e-05
  %v373 = vadd.f32 %v357, 1e-05
  %v374 = vadd.f32 %v358, 1e-05
  %v375 = vadd.f32 %v359, 1e-05
  %v376 = vadd.f32 %v360, 1e-05
  %v377 = vadd.f32 %v361, 1e-05
  %v378 = vadd.f32 %v362, 1e-05
  %v379 = vadd.f32 %v363, 1e-05
  %v380 = vadd.f32 %v364, 1e-05
  %v381 = vadd.f32 %v365, 1e-05
  %v382 = vadd.f32 %v366, 1e-05
  %v383 = vrsqrt.pop %v367
  %v384 = vrsqrt.pop %v368
  %v385 = vrsqrt.pop %v369
  %v386 = vrsqrt.pop %v370
  %v387 = vrsqrt.pop %v371
  %v388 = vrsqrt.pop %v372
  %v389 = vrsqrt.pop %v373
  %v390 = vrsqrt.pop %v374
  %v391 = vrsqrt.pop %v375
  %v392 = vrsqrt.pop %v376
  %v393 = vrsqrt.pop %v377
  %v394 = vrsqrt.pop %v378
  %v395 = vrsqrt.pop %v379
  %v396 = vrsqrt.pop %v380
  %v397 = vrsqrt.pop %v381
  %v398 = vrsqrt.pop %v382
  %v399 = vmul.f32 %v175, %v383
  %v400 = vmul.f32 %v176, %v384
  %v401 = vmul.f32 %v177, %v385
  %v402 = vmul.f32 %v178, %v386
  %v403 = vmul.f32 %v179, %v387
  %v404 = vmul.f32 %v180, %v388
  %v405 = vmul.f32 %v181, %v389
  %v406 = vmul.f32 %v182, %v390
  %v407 = vmul.f32 %v183, %v391
  %v408 = vmul.f32 %v184, %v392
  %v409 = vmul.f32 %v185, %v393
  %v410 = vmul.f32 %v186, %v394
  %v411 = vmul.f32 %v187, %v395
  %v412 = vmul.f32 %v188, %v396
  %v413 = vmul.f32 %v189, %v397
  %v414 = vmul.f32 %v190, %v398
  %v415 = vmul.f32 %v191, %v383
  %v416 = vmul.f32 %v192, %v384
  %v417 = vmul.f32 %v193, %v385
  %v418 = vmul.f32 %v194, %v386
  %v419 = vmul.f32 %v195, %v387
  %v420 = vmul.f32 %v196, %v388
  %v421 = vmul.f32 %v197, %v389
  %v422 = vmul.f32 %v198, %v390
  %v423 = vmul.f32 %v199, %v391
  %v424 = vmul.f32 %v200, %v392
  %v425 = vmul.f32 %v201, %v393
  %v426 = vmul.f32 %v202, %v394
  %v427 = vmul.f32 %v203, %v395
  %v428 = vmul.f32 %v204, %v396
  %v429 = vmul.f32 %v205, %v397
  %v430 = vmul.f32 %v206, %v398
  %v431 = vld [vmem:[%s1] sm:$0xff]
  %v432 = vld [vmem:[%s1 + $0x8] sm:$0xff]
  %v434 = vsel %vm46, %v415, 0
  %v437 = vsel %vm46, %v416, 0
  %v440 = vsel %vm46, %v417, 0
  %v443 = vsel %vm46, %v418, 0
  %v446 = vsel %vm46, %v419, 0
  %v449 = vsel %vm46, %v420, 0
  %v452 = vsel %vm46, %v421, 0
  %v455 = vsel %vm46, %v422, 0
  %v458 = vsel %vm46, %v423, 0
  %v461 = vsel %vm46, %v424, 0
  %v464 = vsel %vm46, %v425, 0
  %v467 = vsel %vm46, %v426, 0
  %v470 = vsel %vm46, %v427, 0
  %v473 = vsel %vm46, %v428, 0
  %v476 = vsel %vm46, %v429, 0
  %v479 = vsel %vm46, %v430, 0
  %481 = vmatprep.subr.mxu0 0.0
  %482 = vmatpush1.msra.mxu0 %v432
  %483 = vmatprep.subr.mxu0 0.0
  %484 = vmatpush1.msra.mxu0 0.0
  %485 = vmatprep.subr.mxu0 0.0
  %486 = vmatpush1.msra.mxu0 0.0
  %487 = vmatprep.subr.mxu0 0.0
  %488 = vmatpush1.msra.mxu0 0.0
  %489 = vmatprep.subr.mxu0 0.0
  %490 = vmatpush1.msra.mxu0 0.0
  %491 = vmatprep.subr.mxu0 0.0
  %492 = vmatpush1.msra.mxu0 0.0
  %493 = vmatprep.subr.mxu0 0.0
  %494 = vmatpush1.msra.mxu0 0.0
  %495 = vmatprep.subr.mxu0 0.0
  %496 = vmatpush1.msra.mxu0 0.0
  %497 = vmatprep.subr.mxu0 0.0
  %498 = vmatpush1.msra.mxu0 0.0
  %499 = vmatprep.subr.mxu0 0.0
  %500 = vmatpush1.msra.mxu0 0.0
  %501 = vmatprep.subr.mxu0 0.0
  %502 = vmatpush1.msra.mxu0 0.0
  %503 = vmatprep.subr.mxu0 0.0
  %504 = vmatpush1.msra.mxu0 0.0
  %505 = vmatprep.subr.mxu0 0.0
  %506 = vmatpush1.msra.mxu0 0.0
  %507 = vmatprep.subr.mxu0 0.0
  %508 = vmatpush1.msra.mxu0 0.0
  %509 = vmatprep.subr.mxu0 0.0
  %510 = vmatpush1.msra.mxu0 0.0
  %511 = vmatprep.subr.mxu0 0.0
  %512 = vmatpush1.msra.mxu0 0.0
  %513 = vmatprep.subr.mxu0 0.0
  %514 = vmatpush1.msra.mxu0 0.0
  %515 = vmatprep.subr.mxu0 0.0
  %516 = vmatpush1.msra.mxu0 0.0
  %517 = vmatprep.subr.mxu0 0.0
  %518 = vmatpush1.msra.mxu0 0.0
  %519 = vmatprep.subr.mxu0 0.0
  %520 = vmatpush1.msra.mxu0 0.0
  %521 = vmatprep.subr.mxu0 0.0
  %522 = vmatpush1.msra.mxu0 0.0
  %523 = vmatprep.subr.mxu0 0.0
  %524 = vmatpush1.msra.mxu0 0.0
  %525 = vmatprep.subr.mxu0 0.0
  %526 = vmatpush1.msra.mxu0 0.0
  %527 = vmatprep.subr.mxu0 0.0
  %528 = vmatpush1.msra.mxu0 0.0
  %529 = vmatprep.subr.mxu0 0.0
  %530 = vmatpush1.msra.mxu0 0.0
  %531 = vmatprep.subr.mxu0 0.0
  %532 = vmatpush1.msra.mxu0 0.0
  %533 = vmatprep.subr.mxu0 0.0
  %534 = vmatpush1.msra.mxu0 0.0
  %535 = vmatprep.subr.mxu0 0.0
  %536 = vmatpush1.msra.mxu0 0.0
  %537 = vmatprep.subr.mxu0 0.0
  %538 = vmatpush1.msra.mxu0 0.0
  %539 = vmatprep.subr.mxu0 0.0
  %540 = vmatpush1.msra.mxu0 0.0
  %541 = vmatprep.subr.mxu0 0.0
  %542 = vmatpush1.msra.mxu0 0.0
  %543 = vmatprep.subr.mxu0 0.0
  %544 = vmatpush1.msra.mxu0 0.0
  %545 = vmatprep.mubr.f32.mxu0 0.0
  %546 = vmatmul.mubr.f32.gmra.mrb[0].mxu0 %v434
  %v547 = vpop.f32.mrb[0].mxu0
  %v548 = vadd.f32 0.0, %v547
  %v549 = vpop.f32.mrb[0].mxu0
  %550 = vmatprep.mubr.f32.mxu0 0.0
  %551 = vmatmul.mubr.f32.gmra.mrb[0].mxu0 %v437
  %v552 = vpop.f32.mrb[0].mxu0
  %v553 = vadd.f32 0.0, %v552
  %v554 = vpop.f32.mrb[0].mxu0
  %555 = vmatprep.mubr.f32.mxu0 0.0
  %556 = vmatmul.mubr.f32.gmra.mrb[0].mxu0 %v440
  %v557 = vpop.f32.mrb[0].mxu0
  %v558 = vadd.f32 0.0, %v557
  %v559 = vpop.f32.mrb[0].mxu0
  %560 = vmatprep.mubr.f32.mxu0 0.0
  %561 = vmatmul.mubr.f32.gmra.mrb[0].mxu0 %v443
  %v562 = vpop.f32.mrb[0].mxu0
  %v563 = vadd.f32 0.0, %v562
  %v564 = vpop.f32.mrb[0].mxu0
  %565 = vmatprep.mubr.f32.mxu0 0.0
  %566 = vmatmul.mubr.f32.gmra.mrb[0].mxu0 %v446
  %v567 = vpop.f32.mrb[0].mxu0
  %v568 = vadd.f32 0.0, %v567
  %v569 = vpop.f32.mrb[0].mxu0
  %570 = vmatprep.mubr.f32.mxu0 0.0
  %571 = vmatmul.mubr.f32.gmra.mrb[0].mxu0 %v449
  %v572 = vpop.f32.mrb[0].mxu0
  %v573 = vadd.f32 0.0, %v572
  %v574 = vpop.f32.mrb[0].mxu0
  %575 = vmatprep.mubr.f32.mxu0 0.0
  %576 = vmatmul.mubr.f32.gmra.mrb[0].mxu0 %v452
  %v577 = vpop.f32.mrb[0].mxu0
  %v578 = vadd.f32 0.0, %v577
  %v579 = vpop.f32.mrb[0].mxu0
  %580 = vmatprep.mubr.f32.mxu0 0.0
  %581 = vmatmul.mubr.f32.gmra.mrb[0].mxu0 %v455
  %v582 = vpop.f32.mrb[0].mxu0
  %v583 = vadd.f32 0.0, %v582
  %v584 = vpop.f32.mrb[0].mxu0
  %585 = vmatprep.mubr.f32.mxu0 0.0
  %586 = vmatmul.mubr.f32.gmra.mrb[0].mxu0 %v458
  %v587 = vpop.f32.mrb[0].mxu0
  %v588 = vadd.f32 0.0, %v587
  %v589 = vpop.f32.mrb[0].mxu0
  %590 = vmatprep.mubr.f32.mxu0 0.0
  %591 = vmatmul.mubr.f32.gmra.mrb[0].mxu0 %v461
  %v592 = vpop.f32.mrb[0].mxu0
  %v593 = vadd.f32 0.0, %v592
  %v594 = vpop.f32.mrb[0].mxu0
  %595 = vmatprep.mubr.f32.mxu0 0.0
  %596 = vmatmul.mubr.f32.gmra.mrb[0].mxu0 %v464
  %v597 = vpop.f32.mrb[0].mxu0
  %v598 = vadd.f32 0.0, %v597
  %v599 = vpop.f32.mrb[0].mxu0
  %600 = vmatprep.mubr.f32.mxu0 0.0
  %601 = vmatmul.mubr.f32.gmra.mrb[0].mxu0 %v467
  %v602 = vpop.f32.mrb[0].mxu0
  %v603 = vadd.f32 0.0, %v602
  %v604 = vpop.f32.mrb[0].mxu0
  %605 = vmatprep.mubr.f32.mxu0 0.0
  %606 = vmatmul.mubr.f32.gmra.mrb[0].mxu0 %v470
  %v607 = vpop.f32.mrb[0].mxu0
  %v608 = vadd.f32 0.0, %v607
  %v609 = vpop.f32.mrb[0].mxu0
  %610 = vmatprep.mubr.f32.mxu0 0.0
  %611 = vmatmul.mubr.f32.gmra.mrb[0].mxu0 %v473
  %v612 = vpop.f32.mrb[0].mxu0
  %v613 = vadd.f32 0.0, %v612
  %v614 = vpop.f32.mrb[0].mxu0
  %615 = vmatprep.mubr.f32.mxu0 0.0
  %616 = vmatmul.mubr.f32.gmra.mrb[0].mxu0 %v476
  %v617 = vpop.f32.mrb[0].mxu0
  %v618 = vadd.f32 0.0, %v617
  %v619 = vpop.f32.mrb[0].mxu0
  %620 = vmatprep.mubr.f32.mxu0 0.0
  %621 = vmatmul.mubr.f32.gmra.mrb[0].mxu0 %v479
  %v622 = vpop.f32.mrb[0].mxu0
  %v623 = vadd.f32 0.0, %v622
  %v624 = vpop.f32.mrb[0].mxu0
  %625 = vdwg.mxu0
  %v627 = vsel %vm46, %v399, 0
  %v630 = vsel %vm46, %v400, 0
  %v633 = vsel %vm46, %v401, 0
  %v636 = vsel %vm46, %v402, 0
  %v639 = vsel %vm46, %v403, 0
  %v642 = vsel %vm46, %v404, 0
  %v645 = vsel %vm46, %v405, 0
  %v648 = vsel %vm46, %v406, 0
  %v651 = vsel %vm46, %v407, 0
  %v654 = vsel %vm46, %v408, 0
  %v657 = vsel %vm46, %v409, 0
  %v660 = vsel %vm46, %v410, 0
  %v663 = vsel %vm46, %v411, 0
  %v666 = vsel %vm46, %v412, 0
  %v669 = vsel %vm46, %v413, 0
  %v672 = vsel %vm46, %v414, 0
  %674 = vmatprep.subr.mxu0 0.0
  %675 = vmatpush1.msra.mxu0 %v431
  %676 = vmatprep.subr.mxu0 0.0
  %677 = vmatpush1.msra.mxu0 0.0
  %678 = vmatprep.subr.mxu0 0.0
  %679 = vmatpush1.msra.mxu0 0.0
  %680 = vmatprep.subr.mxu0 0.0
  %681 = vmatpush1.msra.mxu0 0.0
  %682 = vmatprep.subr.mxu0 0.0
  %683 = vmatpush1.msra.mxu0 0.0
  %684 = vmatprep.subr.mxu0 0.0
  %685 = vmatpush1.msra.mxu0 0.0
  %686 = vmatprep.subr.mxu0 0.0
  %687 = vmatpush1.msra.mxu0 0.0
  %688 = vmatprep.subr.mxu0 0.0
  %689 = vmatpush1.msra.mxu0 0.0
  %690 = vmatprep.subr.mxu0 0.0
  %691 = vmatpush1.msra.mxu0 0.0
  %692 = vmatprep.subr.mxu0 0.0
  %693 = vmatpush1.msra.mxu0 0.0
  %694 = vmatprep.subr.mxu0 0.0
  %695 = vmatpush1.msra.mxu0 0.0
  %696 = vmatprep.subr.mxu0 0.0
  %697 = vmatpush1.msra.mxu0 0.0
  %698 = vmatprep.subr.mxu0 0.0
  %699 = vmatpush1.msra.mxu0 0.0
  %700 = vmatprep.subr.mxu0 0.0
  %701 = vmatpush1.msra.mxu0 0.0
  %702 = vmatprep.subr.mxu0 0.0
  %703 = vmatpush1.msra.mxu0 0.0
  %704 = vmatprep.subr.mxu0 0.0
  %705 = vmatpush1.msra.mxu0 0.0
  %706 = vmatprep.subr.mxu0 0.0
  %707 = vmatpush1.msra.mxu0 0.0
  %708 = vmatprep.subr.mxu0 0.0
  %709 = vmatpush1.msra.mxu0 0.0
  %710 = vmatprep.subr.mxu0 0.0
  %711 = vmatpush1.msra.mxu0 0.0
  %712 = vmatprep.subr.mxu0 0.0
  %713 = vmatpush1.msra.mxu0 0.0
  %714 = vmatprep.subr.mxu0 0.0
  %715 = vmatpush1.msra.mxu0 0.0
  %716 = vmatprep.subr.mxu0 0.0
  %717 = vmatpush1.msra.mxu0 0.0
  %718 = vmatprep.subr.mxu0 0.0
  %719 = vmatpush1.msra.mxu0 0.0
  %720 = vmatprep.subr.mxu0 0.0
  %721 = vmatpush1.msra.mxu0 0.0
  %722 = vmatprep.subr.mxu0 0.0
  %723 = vmatpush1.msra.mxu0 0.0
  %724 = vmatprep.subr.mxu0 0.0
  %725 = vmatpush1.msra.mxu0 0.0
  %726 = vmatprep.subr.mxu0 0.0
  %727 = vmatpush1.msra.mxu0 0.0
  %728 = vmatprep.subr.mxu0 0.0
  %729 = vmatpush1.msra.mxu0 0.0
  %730 = vmatprep.subr.mxu0 0.0
  %731 = vmatpush1.msra.mxu0 0.0
  %732 = vmatprep.subr.mxu0 0.0
  %733 = vmatpush1.msra.mxu0 0.0
  %734 = vmatprep.subr.mxu0 0.0
  %735 = vmatpush1.msra.mxu0 0.0
  %736 = vmatprep.subr.mxu0 0.0
  %737 = vmatpush1.msra.mxu0 0.0
  %738 = vmatprep.mubr.f32.mxu0 0.0
  %739 = vmatmul.mubr.f32.gmra.mrb[0].mxu0 %v627
  %v740 = vpop.f32.mrb[0].mxu0
  %v741 = vadd.f32 %v548, %v740
  %v742 = vpop.f32.mrb[0].mxu0
  %743 = vmatprep.mubr.f32.mxu0 0.0
  %744 = vmatmul.mubr.f32.gmra.mrb[0].mxu0 %v630
  %v745 = vpop.f32.mrb[0].mxu0
  %v746 = vadd.f32 %v553, %v745
  %v747 = vpop.f32.mrb[0].mxu0
  %748 = vmatprep.mubr.f32.mxu0 0.0
  %749 = vmatmul.mubr.f32.gmra.mrb[0].mxu0 %v633
  %v750 = vpop.f32.mrb[0].mxu0
  %v751 = vadd.f32 %v558, %v750
  %v752 = vpop.f32.mrb[0].mxu0
  %753 = vmatprep.mubr.f32.mxu0 0.0
  %754 = vmatmul.mubr.f32.gmra.mrb[0].mxu0 %v636
  %v755 = vpop.f32.mrb[0].mxu0
  %v756 = vadd.f32 %v563, %v755
  %v757 = vpop.f32.mrb[0].mxu0
  %758 = vmatprep.mubr.f32.mxu0 0.0
  %759 = vmatmul.mubr.f32.gmra.mrb[0].mxu0 %v639
  %v760 = vpop.f32.mrb[0].mxu0
  %v761 = vadd.f32 %v568, %v760
  %v762 = vpop.f32.mrb[0].mxu0
  %763 = vmatprep.mubr.f32.mxu0 0.0
  %764 = vmatmul.mubr.f32.gmra.mrb[0].mxu0 %v642
  %v765 = vpop.f32.mrb[0].mxu0
  %v766 = vadd.f32 %v573, %v765
  %v767 = vpop.f32.mrb[0].mxu0
  %768 = vmatprep.mubr.f32.mxu0 0.0
  %769 = vmatmul.mubr.f32.gmra.mrb[0].mxu0 %v645
  %v770 = vpop.f32.mrb[0].mxu0
  %v771 = vadd.f32 %v578, %v770
  %v772 = vpop.f32.mrb[0].mxu0
  %773 = vmatprep.mubr.f32.mxu0 0.0
  %774 = vmatmul.mubr.f32.gmra.mrb[0].mxu0 %v648
  %v775 = vpop.f32.mrb[0].mxu0
  %v776 = vadd.f32 %v583, %v775
  %v777 = vpop.f32.mrb[0].mxu0
  %778 = vmatprep.mubr.f32.mxu0 0.0
  %779 = vmatmul.mubr.f32.gmra.mrb[0].mxu0 %v651
  %v780 = vpop.f32.mrb[0].mxu0
  %v781 = vadd.f32 %v588, %v780
  %v782 = vpop.f32.mrb[0].mxu0
  %783 = vmatprep.mubr.f32.mxu0 0.0
  %784 = vmatmul.mubr.f32.gmra.mrb[0].mxu0 %v654
  %v785 = vpop.f32.mrb[0].mxu0
  %v786 = vadd.f32 %v593, %v785
  %v787 = vpop.f32.mrb[0].mxu0
  %788 = vmatprep.mubr.f32.mxu0 0.0
  %789 = vmatmul.mubr.f32.gmra.mrb[0].mxu0 %v657
  %v790 = vpop.f32.mrb[0].mxu0
  %v791 = vadd.f32 %v598, %v790
  %v792 = vpop.f32.mrb[0].mxu0
  %793 = vmatprep.mubr.f32.mxu0 0.0
  %794 = vmatmul.mubr.f32.gmra.mrb[0].mxu0 %v660
  %v795 = vpop.f32.mrb[0].mxu0
  %v796 = vadd.f32 %v603, %v795
  %v797 = vpop.f32.mrb[0].mxu0
  %798 = vmatprep.mubr.f32.mxu0 0.0
  %799 = vmatmul.mubr.f32.gmra.mrb[0].mxu0 %v663
  %v800 = vpop.f32.mrb[0].mxu0
  %v801 = vadd.f32 %v608, %v800
  %v802 = vpop.f32.mrb[0].mxu0
  %803 = vmatprep.mubr.f32.mxu0 0.0
  %804 = vmatmul.mubr.f32.gmra.mrb[0].mxu0 %v666
  %v805 = vpop.f32.mrb[0].mxu0
  %v806 = vadd.f32 %v613, %v805
  %v807 = vpop.f32.mrb[0].mxu0
  %808 = vmatprep.mubr.f32.mxu0 0.0
  %809 = vmatmul.mubr.f32.gmra.mrb[0].mxu0 %v669
  %v810 = vpop.f32.mrb[0].mxu0
  %v811 = vadd.f32 %v618, %v810
  %v812 = vpop.f32.mrb[0].mxu0
  %813 = vmatprep.mubr.f32.mxu0 0.0
  %814 = vmatmul.mubr.f32.gmra.mrb[0].mxu0 %v672
  %v815 = vpop.f32.mrb[0].mxu0
  %v816 = vadd.f32 %v623, %v815
  %v817 = vpop.f32.mrb[0].mxu0
  %818 = vdwg.mxu0
  %v819 = vld [vmem:[%s2] sm:$0x1]
  %v821 = vlaneseq
  %v822 = vshrl.u32 %v821, 7
  %v823 = vsub.s32 0, %v822
  %v824 = vrot.slane %v819, %v823
  %v826 = vadd.f32 %v741, %v824
  %v827 = vadd.f32 %v746, %v824
  %v828 = vadd.f32 %v751, %v824
  %v829 = vadd.f32 %v756, %v824
  %v830 = vadd.f32 %v761, %v824
  %v831 = vadd.f32 %v766, %v824
  %v832 = vadd.f32 %v771, %v824
  %v833 = vadd.f32 %v776, %v824
  %v834 = vadd.f32 %v781, %v824
  %v835 = vadd.f32 %v786, %v824
  %v836 = vadd.f32 %v791, %v824
  %v837 = vadd.f32 %v796, %v824
  %v838 = vadd.f32 %v801, %v824
  %v839 = vadd.f32 %v806, %v824
  %v840 = vadd.f32 %v811, %v824
  %v841 = vadd.f32 %v816, %v824
  %842 = vst.msk [vmem:[%s3] sm:$0xff] %vm46, %v826
  %843 = vst.msk [vmem:[%s3 + $0x8] sm:$0xff] %vm46, %v827
  %844 = vst.msk [vmem:[%s3 + $0x10] sm:$0xff] %vm46, %v828
  %845 = vst.msk [vmem:[%s3 + $0x18] sm:$0xff] %vm46, %v829
  %846 = vst.msk [vmem:[%s3 + $0x20] sm:$0xff] %vm46, %v830
  %847 = vst.msk [vmem:[%s3 + $0x28] sm:$0xff] %vm46, %v831
  %848 = vst.msk [vmem:[%s3 + $0x30] sm:$0xff] %vm46, %v832
  %849 = vst.msk [vmem:[%s3 + $0x38] sm:$0xff] %vm46, %v833
  %850 = vst.msk [vmem:[%s3 + $0x40] sm:$0xff] %vm46, %v834
  %851 = vst.msk [vmem:[%s3 + $0x48] sm:$0xff] %vm46, %v835
  %852 = vst.msk [vmem:[%s3 + $0x50] sm:$0xff] %vm46, %v836
  %853 = vst.msk [vmem:[%s3 + $0x58] sm:$0xff] %vm46, %v837
  %854 = vst.msk [vmem:[%s3 + $0x60] sm:$0xff] %vm46, %v838
  %855 = vst.msk [vmem:[%s3 + $0x68] sm:$0xff] %vm46, %v839
  %856 = vst.msk [vmem:[%s3 + $0x70] sm:$0xff] %vm46, %v840
  %857 = vst.msk [vmem:[%s3 + $0x78] sm:$0xff] %vm46, %v841
  // Predicated region
  $region14: #{patch_merging_forward.1} parent=0 // pred_check
    _
  $region15: #{patch_merging_forward.1} parent=0 // pred_check_branch
    %859 = sbr.rel (0) target = $region17
  $region16: #{patch_merging_forward.1} parent=0 // pred_region
    _
  $region17: #{patch_merging_forward.1} parent=0 // pred_fallthru
    _
  // Predicated region
  $region18: #{patch_merging_forward.1} parent=0 // pred_check
    _
  $region19: #{patch_merging_forward.1} parent=0 // pred_check_branch
    %861 = sbr.rel (0) target = $region21
  $region20: #{patch_merging_forward.1} parent=0 // pred_region
    _
  $region21: #{patch_merging_forward.1} parent=0 // pred_fallthru
    _

</llo_original>
